<compile_context>
chip_gen: v6e
topology: v6e:2x2x1
jax: 0.10.0
libtpu: 0.0.40
codegen_flags: <defaults>
</compile_context>

<pallas_src>
import jax
import jax.numpy as jnp
from jax.experimental import pallas as pl
from jax.experimental.pallas import tpu as pltpu


def fusion_kernel(xt_ref, xs_ref, w_ref, b_ref, o_ref):
    # xt_ref, xs_ref : (L, tN)   temporal / spatial tiles, lane dim = nodes
    # w_ref          : (L, 2L)   torch nn.Linear(2L, L) weight (un-transposed)
    # b_ref          : (L, 1)    bias (broadcast over lanes)
    # o_ref          : (L, tN)
    xcat = jnp.concatenate([xt_ref[...], xs_ref[...]], axis=0)      # (2L, tN)
    acc = jnp.dot(w_ref[...], xcat, preferred_element_type=jnp.float32)
    o_ref[...] = (acc + b_ref[...]).astype(o_ref.dtype)


def _pick_tile_n(N, L, itemsize, vmem_budget_bytes=24 << 20):
    """Largest lane tile that is a multiple of 128, divides N, and fits VMEM."""
    if N % 128 != 0:
        # TODO(synk): pad N to a multiple of 128 upstream for production; a
        # full-extent lane block keeps correctness for arbitrary N meanwhile.
        return N
    # (2 inputs + 1 output), each double-buffered by the pipeline.
    max_by_vmem = max(128, vmem_budget_bytes // (6 * max(L, 1) * itemsize))
    tn = 128
    while tn * 2 <= min(N, 2048, max_by_vmem) and N % (tn * 2) == 0:
        tn *= 2
    return tn


def fusion_pallas(x_temporal, x_spatial_ln, w, b, *, compute_dtype=None):
    """Fused `Linear(cat([x1, x2], -1))` in left-multiply, lane-dense-N form.

    x_temporal   : (bs, L, N) float  (lane dim = nodes)
    x_spatial_ln : (bs, L, N) float
    w            : (L, 2L)  torch Linear(2L, L) weight, NOT transposed
    b            : (L,)
    returns (bs, L, N)  — already the module's output layout.
    """
    bs, L, N = x_temporal.shape
    assert x_spatial_ln.shape == (bs, L, N)
    assert w.shape == (L, 2 * L) and b.shape == (L,)

    out_dtype = x_temporal.dtype
    if compute_dtype is not None:           # e.g. jnp.bfloat16 on v6e
        x_temporal = x_temporal.astype(compute_dtype)
        x_spatial_ln = x_spatial_ln.astype(compute_dtype)
        w = w.astype(compute_dtype)

    b2 = b.reshape(L, 1).astype(jnp.float32)
    itemsize = jnp.dtype(x_temporal.dtype).itemsize
    tn = _pick_tile_n(N, L, itemsize)
    grid = (bs, N // tn)

    return pl.pallas_call(
        fusion_kernel,
        out_shape=jax.ShapeDtypeStruct((bs, L, N), out_dtype),
        grid=grid,
        in_specs=[
            pl.BlockSpec((None, L, tn), lambda bi, j: (bi, 0, j)),
            pl.BlockSpec((None, L, tn), lambda bi, j: (bi, 0, j)),
            # Grid-invariant operands: fetched once by the pipeline.
            pl.BlockSpec((L, 2 * L), lambda bi, j: (0, 0)),
            pl.BlockSpec((L, 1), lambda bi, j: (0, 0)),
        ],
        out_specs=pl.BlockSpec((None, L, tn), lambda bi, j: (bi, 0, j)),
        compiler_params=pltpu.CompilerParams(
            dimension_semantics=("parallel", "parallel"),
            vmem_limit_bytes=48 * 1024 * 1024,   # fits v7x's 64 MiB VMEM
        ),
    )(x_temporal, x_spatial_ln, w, b2)


def init_params(key, seq_len):
    """Deterministic init matching nn.Linear(2*seq_len, seq_len) defaults."""
    k_w, k_b = jax.random.split(key)
    fan_in = 2 * seq_len
    bound = 1.0 / jnp.sqrt(fan_in)
    # torch weight shape: (out=seq_len, in=2*seq_len) — kept as-is (no transpose).
    w = jax.random.uniform(k_w, (seq_len, 2 * seq_len), jnp.float32, -bound, bound)
    b = jax.random.uniform(k_b, (seq_len,), jnp.float32, -bound, bound)
    return {"w": w, "b": b}


def t_stgcn_forward(x_enc, params):
    """x_enc: (bs, seq_len, N) -> (bs, seq_len, N), mirroring T_STGCN.forward."""
    bs, seq_len, N = x_enc.shape

    # TODO(synk): Spatial/gcnSpatial + distance_matrix(path) (file read, argsort
    # top-k) were not provided; stand-in keeps the documented (bs, N, seq_len)
    # spatial output layout.
    x_spatial = jnp.transpose(x_enc, (0, 2, 1))          # (bs, N, seq_len)

    # TODO(synk): autoformer temporal model was not provided; stand-in keeps the
    # documented (bs, seq_len, N) temporal output layout.
    x_temporal = x_enc                                   # (bs, seq_len, N)

    # Kernel runs with nodes on the lane axis, so the temporal input and the
    # final output need no transpose; only the spatial input is brought to
    # (bs, seq_len, N).  (With the stub above, XLA cancels this transpose pair.)
    x_spatial_ln = jnp.transpose(x_spatial, (0, 2, 1))   # (bs, seq_len, N)

    return fusion_pallas(x_temporal, x_spatial_ln, params["w"], params["b"])


def _reference(x_enc, params):
    """Pure-JAX reference of the same fused computation (torch semantics)."""
    x_temporal = x_enc                                   # (bs, L, N)
    x_spatial = jnp.transpose(x_enc, (0, 2, 1))          # (bs, N, L)
    x1 = jnp.transpose(x_temporal, (0, 2, 1))            # (bs, N, L)
    cat = jnp.concatenate([x1, x_spatial], axis=-1)      # (bs, N, 2L)
    out = jnp.einsum("bnk,ok->bno", cat, params["w"]) + params["b"]  # (bs, N, L)
    return jnp.transpose(out, (0, 2, 1))                 # (bs, L, N)


if __name__ == "__main__":
    bs, seq_len, N = 2, 8, 256   # x_enc: bs * seq_len * N (N lane-dense)

    key = jax.random.PRNGKey(0)
    k_x, k_p = jax.random.split(key)
    x_enc = jax.random.normal(k_x, (bs, seq_len, N), dtype=jnp.float32)
    params = init_params(k_p, seq_len)

    out = t_stgcn_forward(x_enc, params)
    out = jax.block_until_ready(out)

    ref = _reference(x_enc, params)
    assert out.shape == (bs, seq_len, N)
    assert jnp.allclose(out, ref, atol=1e-4, rtol=1e-4)

    print("KERNEL_OK")
</pallas_src>

<mosaic_0001>
module attributes {stable_mosaic.version = 11 : i64} {
  func.func @fusion_kernel(%arg0: i32, %arg1: i32, %arg2: memref<1x8x256xf32, #tpu.memory_space<vmem>>, %arg3: memref<1x8x256xf32, #tpu.memory_space<vmem>>, %arg4: memref<8x16xf32, #tpu.memory_space<vmem>>, %arg5: memref<8x1xf32, #tpu.memory_space<vmem>>, %arg6: memref<1x8x256xf32, #tpu.memory_space<vmem>>) attributes {dimension_semantics = [#tpu.dimension_semantics<parallel>, #tpu.dimension_semantics<parallel>], iteration_bounds = array<i64: 2, 1>, scalar_prefetch = 0 : i64, scratch_operands = 0 : i64, tpu.core_type = #tpu.core_type<tc>, window_params = [{transform_indices = @transform_0, window_bounds = array<i64: 1, 8, 256>}, {transform_indices = @transform_1, window_bounds = array<i64: 1, 8, 256>}, {pipeline_mode = #tpu.pipeline_mode<synchronous>, transform_indices = @transform_2, window_bounds = array<i64: 8, 16>}, {pipeline_mode = #tpu.pipeline_mode<synchronous>, transform_indices = @transform_3, window_bounds = array<i64: 8, 1>}, {transform_indices = @transform_4, window_bounds = array<i64: 1, 8, 256>}]} {
    %c0 = arith.constant 0 : index
    %c0_0 = arith.constant 0 : index
    %c0_1 = arith.constant 0 : index
    %0 = vector.load %arg2[%c0, %c0_0, %c0_1] : memref<1x8x256xf32, #tpu.memory_space<vmem>>, vector<1x8x256xf32>
    %1 = vector.shape_cast %0 : vector<1x8x256xf32> to vector<8x256xf32>
    %c0_2 = arith.constant 0 : index
    %c0_3 = arith.constant 0 : index
    %c0_4 = arith.constant 0 : index
    %2 = vector.load %arg3[%c0_2, %c0_3, %c0_4] : memref<1x8x256xf32, #tpu.memory_space<vmem>>, vector<1x8x256xf32>
    %3 = vector.shape_cast %2 : vector<1x8x256xf32> to vector<8x256xf32>
    %4 = tpu.concatenate %1, %3 in 0 : vector<8x256xf32>, vector<8x256xf32> -> vector<16x256xf32>
    %c0_5 = arith.constant 0 : index
    %c0_6 = arith.constant 0 : index
    %5 = vector.load %arg4[%c0_5, %c0_6] : memref<8x16xf32, #tpu.memory_space<vmem>>, vector<8x16xf32>
    %cst = arith.constant dense<0.000000e+00> : vector<8x256xf32>
    %6 = tpu.matmul %5, %4, %cst {dimension_numbers = #tpu.dot_dimension_numbers<[1], [0], [0], [1], [0, 0, 1, 1], [], []>} : vector<8x16xf32>, vector<16x256xf32>, vector<8x256xf32> -> vector<8x256xf32>
    %c0_7 = arith.constant 0 : index
    %c0_8 = arith.constant 0 : index
    %7 = vector.load %arg5[%c0_7, %c0_8] : memref<8x1xf32, #tpu.memory_space<vmem>>, vector<8x1xf32>
    %8 = vector.broadcast %7 : vector<8x1xf32> to vector<8x256xf32>
    %9 = arith.addf %6, %8 : vector<8x256xf32>
    %c0_9 = arith.constant 0 : index
    %c0_10 = arith.constant 0 : index
    %c0_11 = arith.constant 0 : index
    %10 = vector.load %arg6[%c0_9, %c0_10, %c0_11] : memref<1x8x256xf32, #tpu.memory_space<vmem>>, vector<1x8x256xf32>
    %11 = vector.shape_cast %10 : vector<1x8x256xf32> to vector<8x256xf32>
    %12 = vector.shape_cast %9 : vector<8x256xf32> to vector<1x8x256xf32>
    tpu.vector_store %arg6[%c0_9, %c0_10, %c0_11], %12 {strides = array<i32>} : memref<1x8x256xf32, #tpu.memory_space<vmem>>, vector<1x8x256xf32>,
    return
  }
  func.func @transform_0(%arg0: i32, %arg1: i32) -> (i32, i32, i32) {
    %c0_i32 = arith.constant 0 : i32
    %c0_i32_0 = arith.constant 0 : i32
    return %arg0, %c0_i32, %arg1 : i32, i32, i32
  }
  func.func @transform_1(%arg0: i32, %arg1: i32) -> (i32, i32, i32) {
    %c0_i32 = arith.constant 0 : i32
    %c0_i32_0 = arith.constant 0 : i32
    return %arg0, %c0_i32, %arg1 : i32, i32, i32
  }
  func.func @transform_2(%arg0: i32, %arg1: i32) -> (i32, i32) {
    %c0_i32 = arith.constant 0 : i32
    %c0_i32_0 = arith.constant 0 : i32
    %c0_i32_1 = arith.constant 0 : i32
    return %c0_i32, %c0_i32_0 : i32, i32
  }
  func.func @transform_3(%arg0: i32, %arg1: i32) -> (i32, i32) {
    %c0_i32 = arith.constant 0 : i32
    %c0_i32_0 = arith.constant 0 : i32
    %c0_i32_1 = arith.constant 0 : i32
    return %c0_i32, %c0_i32_0 : i32, i32
  }
  func.func @transform_4(%arg0: i32, %arg1: i32) -> (i32, i32, i32) {
    %c0_i32 = arith.constant 0 : i32
    %c0_i32_0 = arith.constant 0 : i32
    return %arg0, %c0_i32, %arg1 : i32, i32, i32
  }
}

</mosaic_0001>

<llo_original>
// kernel: tpu_custom_call.1
$region0: #{tpu_custom_call.1}
  #allocation0 [shape = 'u32[]', space=smem, size = 0x4, offset = 0x4, fixed_abs, tag = 'smem constant byte address 0x4 - core index']
  #allocation1 [shape = 'u32[144,128]{1,0:T(1,128)}', space=vmem, size = 0x12000, scoped, tag = 'internal scratch']
  %s0 = inlined_call_operand.hbm [shape: f32[2,8,256], index: 0, kind: input, shape index: {}]
  %s1 = inlined_call_operand.hbm [shape: f32[2,8,256], index: 1, kind: input, shape index: {}]
  %s2 = inlined_call_operand.vmem [shape: f32[8,16], index: 2, kind: input, shape index: {}]
  %s3 = inlined_call_operand.vmem [shape: f32[8,1], index: 3, kind: input, shape index: {}]
  %s4 = inlined_call_operand.hbm [shape: f32[2,8,256], index: 4, kind: output, shape index: {}]
  %s5 = sld [smem:[#allocation0]]
  $region57: #{tpu_custom_call.1} parent=0
    _
  %s7 = ssub.s32 1, %s5
  %s8 = scalar_select 0, %s7, %s5
  $region1: #{tpu_custom_call.1} parent=0
    #allocation2 [shape = 'u8[16384]{0}', space=vmem, size = 0x4000, scoped, tag = 'input window, operand 0']
    #allocation3 [shape = 's32[2]{0}', space=sflag, size = 0x8, scoped, tag = 'scoped memory for tpu_custom_call.1']
    #allocation4 [shape = 's32[2]{0}', space=sflag, size = 0x8, scoped, tag = 'scoped memory for tpu_custom_call.1']
    #allocation5 [shape = 'u8[16384]{0}', space=vmem, size = 0x4000, scoped, tag = 'input window, operand 1']
    #allocation6 [shape = 's32[2]{0}', space=sflag, size = 0x8, scoped, tag = 'scoped memory for tpu_custom_call.1']
    #allocation7 [shape = 'u8[16384]{0}', space=vmem, size = 0x4000, scoped, tag = 'output window, operand 0']
    %9 = vsyncpa [#allocation3], 0
    %s10 = scalar_lea.sflag [#allocation3], 1
    %11 = vsyncpa %s10, 0
    %12 = vsyncpa [#allocation6], 0
    %s13 = scalar_lea.sflag [#allocation6], 1
    %14 = vsyncpa %s13, 0
    %15 = vsyncpa [#allocation4], 0
    %s16 = scalar_lea.sflag [#allocation4], 1
    %17 = vsyncpa %s16, 0
    loop: start=0, step=1, limit=4
    $region2: #{tpu_custom_call.1} parent=1 // loop_pre_header
      _
    $region3: #{tpu_custom_call.1} parent=1 // loop_header
      %s19 = sphi 0, %s23
      %p20 = scmp.ge.s32.totalorder %s19, 4
      %s26 = sphi 0, %s38
      %s27 = sphi 0, %s34
      %s28 = sphi 0, %s26
      %s29 = sphi 0, %s27
      %s30 = sphi 0, %s28
      %s31 = sphi 0, %s29
      %s43 = sphi 0, %s45
      %s46 = sphi 0, %s43
      %s47 = sphi 0, %s46
      %s63 = sphi 0, %s47
      %s71 = sphi 0, %s73
      %s74 = sphi 0, %s71
      %s75 = sphi 0, %s74
      %s91 = sphi 0, %s75
      %s95 = sphi 0, %s95
      %s97 = sphi 0, %s95
      %s98 = sphi 0, %s97
      %s112 = sphi 0, %s98
      %s116 = sphi 0, %s116
      %s118 = sphi 0, %s116
      %s119 = sphi 0, %s118
      %s133 = sphi 0, %s119
      %s141 = sphi 0, %s143
      %s144 = sphi 0, %s141
      %s145 = sphi 0, %s144
      %s161 = sphi 0, %s145
    $region4: #{tpu_custom_call.1} parent=1 // loop_header_branch
      %22 = sbr.rel (%p20) target = $region8
    $region5: #{tpu_custom_call.1} parent=1 // loop_body
      %s24 = ssub.s32 %s19, 1
      %s25 = ssub.s32 %s19, 2
      %s32 = sadd.s32 1, %s27
      %p33 = scmp.ge.s32.totalorder %s32, 1
      %s34 = scalar_select %p33, 0, %s32
      %s35 = sadd.s32 1, %s26
      %s36 = scalar_select %p33, %s35, %s26
      %p37 = scmp.ge.s32.totalorder %s36, 2
      %s38 = scalar_select %p37, 0, %s36
      %s39 = ssub.s32 %s26, %s38
      %s40 = ssub.s32 %s27, %s34
      %s41 = sor.u32 %s39, %s40
      %p42 = scmp.eq.s32.totalorder %s41, 0
      %s44 = sadd.s32 %s43, 1
      %s45 = scalar_select %p42, %s43, %s44
      %p48 = pneg %p42
      %p49 = scmp.eq.s32.totalorder %s19, 1
      %p50 = por %p48, %p49
      %p51 = scmp.ne.s32.totalorder %s43, %s46
      %p52 = scmp.eq.s32.totalorder %s19, 0
      %p53 = por %p51, %p52
      %p54 = scmp.ne.s32.totalorder %s43, %s46
      %p55 = scmp.eq.s32.totalorder %s24, 1
      %p56 = por %p54, %p55
      %p57 = scmp.ne.s32.totalorder %s46, %s47
      %p58 = scmp.eq.s32.totalorder %s24, 0
      %p59 = por %p57, %p58
      %p60 = scmp.ne.s32.totalorder %s46, %s47
      %p61 = scmp.eq.s32.totalorder %s25, 1
      %p62 = por %p60, %p61
      %p64 = scmp.ne.s32.totalorder %s47, %s63
      %p65 = scmp.eq.s32.totalorder %s25, 0
      %p66 = por %p64, %p65
      %s67 = ssub.s32 %s26, %s38
      %s68 = ssub.s32 %s27, %s34
      %s69 = sor.u32 %s67, %s68
      %p70 = scmp.eq.s32.totalorder %s69, 0
      %s72 = sadd.s32 %s71, 1
      %s73 = scalar_select %p70, %s71, %s72
      %p76 = pneg %p70
      %p77 = scmp.eq.s32.totalorder %s19, 1
      %p78 = por %p76, %p77
      %p79 = scmp.ne.s32.totalorder %s71, %s74
      %p80 = scmp.eq.s32.totalorder %s19, 0
      %p81 = por %p79, %p80
      %p82 = scmp.ne.s32.totalorder %s71, %s74
      %p83 = scmp.eq.s32.totalorder %s24, 1
      %p84 = por %p82, %p83
      %p85 = scmp.ne.s32.totalorder %s74, %s75
      %p86 = scmp.eq.s32.totalorder %s24, 0
      %p87 = por %p85, %p86
      %p88 = scmp.ne.s32.totalorder %s74, %s75
      %p89 = scmp.eq.s32.totalorder %s25, 1
      %p90 = por %p88, %p89
      %p92 = scmp.ne.s32.totalorder %s75, %s91
      %p93 = scmp.eq.s32.totalorder %s25, 0
      %p94 = por %p92, %p93
      %s96 = sadd.s32 %s95, 1
      %p99 = scmp.eq.s32.totalorder %s19, 1
      %p100 = scmp.ne.s32.totalorder %s95, %s97
      %p101 = scmp.eq.s32.totalorder %s19, 0
      %p102 = por %p100, %p101
      %p103 = scmp.ne.s32.totalorder %s95, %s97
      %p104 = scmp.eq.s32.totalorder %s24, 1
      %p105 = por %p103, %p104
      %p106 = scmp.ne.s32.totalorder %s97, %s98
      %p107 = scmp.eq.s32.totalorder %s24, 0
      %p108 = por %p106, %p107
      %p109 = scmp.ne.s32.totalorder %s97, %s98
      %p110 = scmp.eq.s32.totalorder %s25, 1
      %p111 = por %p109, %p110
      %p113 = scmp.ne.s32.totalorder %s98, %s112
      %p114 = scmp.eq.s32.totalorder %s25, 0
      %p115 = por %p113, %p114
      %s117 = sadd.s32 %s116, 1
      %p120 = scmp.eq.s32.totalorder %s19, 1
      %p121 = scmp.ne.s32.totalorder %s116, %s118
      %p122 = scmp.eq.s32.totalorder %s19, 0
      %p123 = por %p121, %p122
      %p124 = scmp.ne.s32.totalorder %s116, %s118
      %p125 = scmp.eq.s32.totalorder %s24, 1
      %p126 = por %p124, %p125
      %p127 = scmp.ne.s32.totalorder %s118, %s119
      %p128 = scmp.eq.s32.totalorder %s24, 0
      %p129 = por %p127, %p128
      %p130 = scmp.ne.s32.totalorder %s118, %s119
      %p131 = scmp.eq.s32.totalorder %s25, 1
      %p132 = por %p130, %p131
      %p134 = scmp.ne.s32.totalorder %s119, %s133
      %p135 = scmp.eq.s32.totalorder %s25, 0
      %p136 = por %p134, %p135
      %s137 = ssub.s32 %s26, %s38
      %s138 = ssub.s32 %s27, %s34
      %s139 = sor.u32 %s137, %s138
      %p140 = scmp.eq.s32.totalorder %s139, 0
      %s142 = sadd.s32 %s141, 1
      %s143 = scalar_select %p140, %s141, %s142
      %p146 = pneg %p140
      %p147 = scmp.eq.s32.totalorder %s19, 1
      %p148 = por %p146, %p147
      %p149 = scmp.ne.s32.totalorder %s141, %s144
      %p150 = scmp.eq.s32.totalorder %s19, 0
      %p151 = por %p149, %p150
      %p152 = scmp.ne.s32.totalorder %s141, %s144
      %p153 = scmp.eq.s32.totalorder %s24, 1
      %p154 = por %p152, %p153
      %p155 = scmp.ne.s32.totalorder %s144, %s145
      %p156 = scmp.eq.s32.totalorder %s24, 0
      %p157 = por %p155, %p156
      %p158 = scmp.ne.s32.totalorder %s144, %s145
      %p159 = scmp.eq.s32.totalorder %s25, 1
      %p160 = por %p158, %p159
      %p162 = scmp.ne.s32.totalorder %s145, %s161
      %p163 = scmp.eq.s32.totalorder %s25, 0
      %p164 = por %p162, %p163
      %p165 = scmp.le.s32.totalorder 1, %s19
      %p166 = scmp.lt.s32.totalorder %s19, 3
      %p167 = pnand %p165, %p166
      %p168 = pneg %p167
      // Predicated region
      $region9: #{tpu_custom_call.1} parent=5 // pred_check
        _
      $region10: #{tpu_custom_call.1} parent=5 // pred_check_branch
        %170 = sbr.rel (%p167) target = $region12
      $region11: #{tpu_custom_call.1} parent=5 // pred_region
        %s171 = ssub.s32 %s19, 1
        // Predicated region
        $region13: #{tpu_custom_call.1} parent=11 // pred_check
          %p172 = pneg %p108
        $region14: #{tpu_custom_call.1} parent=11 // pred_check_branch
          %174 = sbr.rel (%p172) target = $region16
        $region15: #{tpu_custom_call.1} parent=11 // pred_region
          _
        $region16: #{tpu_custom_call.1} parent=11 // pred_fallthru
          _
        // Predicated region
        $region17: #{tpu_custom_call.1} parent=11 // pred_check
          %p175 = pneg %p129
        $region18: #{tpu_custom_call.1} parent=11 // pred_check_branch
          %177 = sbr.rel (%p175) target = $region20
        $region19: #{tpu_custom_call.1} parent=11 // pred_region
          _
        $region20: #{tpu_custom_call.1} parent=11 // pred_fallthru
          _
      $region12: #{tpu_custom_call.1} parent=5 // pred_fallthru
        _
      %p178 = scmp.lt.s32.totalorder %s19, 2
      // Predicated region
      $region21: #{tpu_custom_call.1} parent=5 // pred_check
        %p179 = pneg %p178
      $region22: #{tpu_custom_call.1} parent=5 // pred_check_branch
        %181 = sbr.rel (%p179) target = $region24
      $region23: #{tpu_custom_call.1} parent=5 // pred_region
        // Predicated region
        $region25: #{tpu_custom_call.1} parent=23 // pred_check
          %p182 = pneg %p53
        $region26: #{tpu_custom_call.1} parent=23 // pred_check_branch
          %184 = sbr.rel (%p182) target = $region28
        $region27: #{tpu_custom_call.1} parent=23 // pred_region
          %s185 = sand.u32 %s43, 1
          %s186 = scalar_lea.sflag [#allocation3], %s185
          %s187 = sand.u32 %s43, 1
          %s188 = smul.addr %s187, 16
          %s189 = scalar_lea.vmem [#allocation2], %s188
          %s190 = smul.u32 2, %s27
          %s192 = ssub.s32 256, 256
          %193 = vsyncadd %s186, %s192
          %s194 = smul.addr %s26, 2
          %s195 = sadd.s32 %s190, %s194
          %s196 = smul.addr %s195, 128
          %s197 = scalar_lea.hbm %s0, %s196
          %s199 = sshll.u32 %s189, 4
          %s200 = int_to_ptr.vmem [resolvable:$true] %s199
          %202 = dma.hbm_to_vmem [thread:$0]  %s197, 256, %s200, %s186
        $region28: #{tpu_custom_call.1} parent=23 // pred_fallthru
          _
        // Predicated region
        $region29: #{tpu_custom_call.1} parent=23 // pred_check
          %p203 = pneg %p81
        $region30: #{tpu_custom_call.1} parent=23 // pred_check_branch
          %205 = sbr.rel (%p203) target = $region32
        $region31: #{tpu_custom_call.1} parent=23 // pred_region
          %s206 = sand.u32 %s71, 1
          %s207 = scalar_lea.sflag [#allocation6], %s206
          %s208 = sand.u32 %s71, 1
          %s209 = smul.addr %s208, 16
          %s210 = scalar_lea.vmem [#allocation5], %s209
          %s211 = smul.u32 2, %s27
          %s213 = ssub.s32 256, 256
          %214 = vsyncadd %s207, %s213
          %s215 = smul.addr %s26, 2
          %s216 = sadd.s32 %s211, %s215
          %s217 = smul.addr %s216, 128
          %s218 = scalar_lea.hbm %s1, %s217
          %s220 = sshll.u32 %s210, 4
          %s221 = int_to_ptr.vmem [resolvable:$true] %s220
          %223 = dma.hbm_to_vmem [thread:$0]  %s218, 256, %s221, %s207
        $region32: #{tpu_custom_call.1} parent=23 // pred_fallthru
          _
      $region24: #{tpu_custom_call.1} parent=5 // pred_fallthru
        _
      %p224 = scmp.le.s32.totalorder 1, %s19
      %p225 = scmp.lt.s32.totalorder %s19, 3
      %p226 = pnand %p224, %p225
      %p227 = pneg %p226
      // Predicated region
      $region33: #{tpu_custom_call.1} parent=5 // pred_check
        _
      $region34: #{tpu_custom_call.1} parent=5 // pred_check_branch
        %229 = sbr.rel (%p226) target = $region36
      $region35: #{tpu_custom_call.1} parent=5 // pred_region
        %s230 = ssub.s32 %s19, 1
        %s231 = sand.u32 %s46, 1
        %s232 = scalar_lea.sflag [#allocation3], %s231
        %s233 = sand.u32 %s46, 1
        %s234 = smul.addr %s233, 16
        %s235 = scalar_lea.vmem [#allocation2], %s234
        // Predicated region
        $region37: #{tpu_custom_call.1} parent=35 // pred_check
          %p236 = pneg %p59
        $region38: #{tpu_custom_call.1} parent=35 // pred_check_branch
          %238 = sbr.rel (%p236) target = $region40
        $region39: #{tpu_custom_call.1} parent=35 // pred_region
          %239 = dma.done %s232, 256
        $region40: #{tpu_custom_call.1} parent=35 // pred_fallthru
          _
        %s240 = sand.u32 %s74, 1
        %s241 = scalar_lea.sflag [#allocation6], %s240
        %s242 = sand.u32 %s74, 1
        %s243 = smul.addr %s242, 16
        %s244 = scalar_lea.vmem [#allocation5], %s243
        // Predicated region
        $region41: #{tpu_custom_call.1} parent=35 // pred_check
          %p245 = pneg %p87
        $region42: #{tpu_custom_call.1} parent=35 // pred_check_branch
          %247 = sbr.rel (%p245) target = $region44
        $region43: #{tpu_custom_call.1} parent=35 // pred_region
          %248 = dma.done %s241, 256
        $region44: #{tpu_custom_call.1} parent=35 // pred_fallthru
          _
        %s249 = sand.u32 %s46, 1
        %s250 = scalar_lea.sflag [#allocation3], %s249
        %s251 = sand.u32 %s46, 1
        %s252 = smul.addr %s251, 16
        %s253 = scalar_lea.vmem [#allocation2], %s252
        %p254 = pneg %p59
        %p255 = pneg %p56
        %s256 = sand.u32 %s74, 1
        %s257 = scalar_lea.sflag [#allocation6], %s256
        %s258 = sand.u32 %s74, 1
        %s259 = smul.addr %s258, 16
        %s260 = scalar_lea.vmem [#allocation5], %s259
        %p261 = pneg %p87
        %p262 = pneg %p84
        %p263 = pneg %p108
        %p264 = pneg %p105
        %p265 = pneg %p129
        %p266 = pneg %p126
        %p267 = pneg %p157
        %p268 = pneg %p154
        %s269 = sand.u32 %s144, 1
        %s270 = scalar_lea.sflag [#allocation4], %s269
        %s271 = sand.u32 %s144, 1
        %s272 = smul.addr %s271, 16
        %s273 = scalar_lea.vmem [#allocation7], %s272
        %s274 = smul.u32 2, %s29
        %s275 = smul.u32 2, %s29
        %s276 = smul.u32 2, %s29
        %v277 = vld [vmem:[%s235] sm:$0xff]
        %v278 = vld [vmem:[%s235 + $0x8] sm:$0xff]
        %v279 = vld [vmem:[%s244] sm:$0xff]
        %v280 = vld [vmem:[%s244 + $0x8] sm:$0xff]
        %v281 = vld [vmem:[%s2] sm:$0xff]
        %v282 = vld [vmem:[%s3] sm:$0xff]
        %284 = vset.pattern.permute.xlu0 0
        %285 = vperm.xlu0 %284, %v282
        %v286 = vpop.permute.xlu0 %285
        %vm288 = vcmask 130048
        %v290 = vsel %vm288, %v281, 0
        %292 = vmatprep.subr.mxu0 0.0
        %293 = vmatpush1.msra.mxu0 0.0
        %294 = vmatprep.subr.mxu0 0.0
        %295 = vmatpush1.msra.mxu0 0.0
        %296 = vmatprep.subr.mxu0 0.0
        %297 = vmatpush1.msra.mxu0 0.0
        %298 = vmatprep.subr.mxu0 0.0
        %299 = vmatpush1.msra.mxu0 0.0
        %300 = vmatprep.subr.mxu0 0.0
        %301 = vmatpush1.msra.mxu0 0.0
        %302 = vmatprep.subr.mxu0 0.0
        %303 = vmatpush1.msra.mxu0 0.0
        %304 = vmatprep.subr.mxu0 0.0
        %305 = vmatpush1.msra.mxu0 0.0
        %306 = vmatprep.subr.mxu0 0.0
        %307 = vmatpush1.msra.mxu0 0.0
        %308 = vmatprep.subr.mxu0 0.0
        %309 = vmatpush1.msra.mxu0 0.0
        %310 = vmatprep.subr.mxu0 0.0
        %311 = vmatpush1.msra.mxu0 0.0
        %312 = vmatprep.subr.mxu0 0.0
        %313 = vmatpush1.msra.mxu0 0.0
        %314 = vmatprep.subr.mxu0 0.0
        %315 = vmatpush1.msra.mxu0 0.0
        %316 = vmatprep.subr.mxu0 0.0
        %317 = vmatpush1.msra.mxu0 0.0
        %318 = vmatprep.subr.mxu0 0.0
        %319 = vmatpush1.msra.mxu0 0.0
        %320 = vmatprep.subr.mxu0 %v280
        %321 = vmatpush1.msra.mxu0 %v279
        %322 = vmatprep.subr.mxu0 %v278
        %323 = vmatpush1.msra.mxu0 %v277
        %324 = vmatprep.subr.mxu0 0.0
        %325 = vmatpush2.msra.mxu0 0.0
        %326 = vmatprep.subr.mxu0 0.0
        %327 = vmatpush2.msra.mxu0 0.0
        %328 = vmatprep.subr.mxu0 0.0
        %329 = vmatpush2.msra.mxu0 0.0
        %330 = vmatprep.subr.mxu0 0.0
        %331 = vmatpush2.msra.mxu0 0.0
        %332 = vmatprep.subr.mxu0 0.0
        %333 = vmatpush2.msra.mxu0 0.0
        %334 = vmatprep.subr.mxu0 0.0
        %335 = vmatpush2.msra.mxu0 0.0
        %336 = vmatprep.subr.mxu0 0.0
        %337 = vmatpush2.msra.mxu0 0.0
        %338 = vmatprep.subr.mxu0 0.0
        %339 = vmatpush2.msra.mxu0 0.0
        %340 = vmatprep.subr.mxu0 0.0
        %341 = vmatpush2.msra.mxu0 0.0
        %342 = vmatprep.subr.mxu0 0.0
        %343 = vmatpush2.msra.mxu0 0.0
        %344 = vmatprep.subr.mxu0 0.0
        %345 = vmatpush2.msra.mxu0 0.0
        %346 = vmatprep.subr.mxu0 0.0
        %347 = vmatpush2.msra.mxu0 0.0
        %348 = vmatprep.subr.mxu0 0.0
        %349 = vmatpush2.msra.mxu0 0.0
        %350 = vmatprep.subr.mxu0 0.0
        %351 = vmatpush2.msra.mxu0 0.0
        %352 = vmatprep.subr.mxu0 0.0
        %353 = vmatpush2.msra.mxu0 0.0
        %354 = vmatprep.subr.mxu0 0.0
        %355 = vmatpush2.msra.mxu0 0.0
        %356 = vmatprep.mubr.f32.mxu0 0.0
        %357 = vmatmul.mubr.f32.gmra.mxu0 %v290
        %v358 = vpop.f32.mrf.mxu0
        %v359 = vadd.f32 %v286, %v358
        %v360 = vpop.f32.mrf.mxu0
        %v361 = vadd.f32 %v286, %v360
        %362 = vdwg.mxu0
        %363 = vst [vmem:[%s273] sm:$0xff] %v359
        %364 = vst [vmem:[%s273 + $0x8] sm:$0xff] %v361
        %s365 = sand.u32 %s144, 1
        %s366 = scalar_lea.sflag [#allocation4], %s365
        %s367 = sand.u32 %s144, 1
        %s368 = smul.addr %s367, 16
        %s369 = scalar_lea.vmem [#allocation7], %s368
        // Predicated region
        $region45: #{tpu_custom_call.1} parent=35 // pred_check
          %p370 = pneg %p154
        $region46: #{tpu_custom_call.1} parent=35 // pred_check_branch
          %372 = sbr.rel (%p370) target = $region48
        $region47: #{tpu_custom_call.1} parent=35 // pred_region
          %s373 = smul.u32 2, %s29
          %s375 = ssub.s32 256, 256
          %376 = vsyncadd %s366, %s375
          %s377 = smul.addr %s28, 2
          %s378 = sadd.s32 %s373, %s377
          %s379 = smul.addr %s378, 128
          %s380 = scalar_lea.hbm %s4, %s379
          %s382 = sshll.u32 %s369, 4
          %s383 = int_to_ptr.vmem [resolvable:$true] %s382
          %385 = dma.vmem_to_hbm [thread:$0]  %s383, 256, %s380, %s366
        $region48: #{tpu_custom_call.1} parent=35 // pred_fallthru
          _
      $region36: #{tpu_custom_call.1} parent=5 // pred_fallthru
        _
      %p386 = scmp.le.s32.totalorder 2, %s19
      // Predicated region
      $region49: #{tpu_custom_call.1} parent=5 // pred_check
        %p387 = pneg %p386
      $region50: #{tpu_custom_call.1} parent=5 // pred_check_branch
        %389 = sbr.rel (%p387) target = $region52
      $region51: #{tpu_custom_call.1} parent=5 // pred_region
        %s390 = ssub.s32 %s19, 2
        // Predicated region
        $region53: #{tpu_custom_call.1} parent=51 // pred_check
          %p391 = pneg %p160
        $region54: #{tpu_custom_call.1} parent=51 // pred_check_branch
          %393 = sbr.rel (%p391) target = $region56
        $region55: #{tpu_custom_call.1} parent=51 // pred_region
          %s394 = sand.u32 %s145, 1
          %s395 = scalar_lea.sflag [#allocation4], %s394
          %s396 = sand.u32 %s145, 1
          %s397 = smul.addr %s396, 16
          %s398 = scalar_lea.vmem [#allocation7], %s397
          %399 = dma.done %s395, 256
        $region56: #{tpu_custom_call.1} parent=51 // pred_fallthru
          _
      $region52: #{tpu_custom_call.1} parent=5 // pred_fallthru
        _
    $region6: #{tpu_custom_call.1} parent=1 // loop_footer
      %s23 = sadd.s32 1, %s19
    $region7: #{tpu_custom_call.1} parent=1 // loop_footer_branch
      %18 = sbr.rel target = $region3
    $region8: #{tpu_custom_call.1} parent=1 // loop_exit
      _
    %400 = vsyncpa [#allocation3], 1
    %s401 = scalar_lea.sflag [#allocation3], 1
    %402 = vsyncpa %s401, 1
    %403 = vsyncpa [#allocation6], 1
    %s404 = scalar_lea.sflag [#allocation6], 1
    %405 = vsyncpa %s404, 1
    %406 = vsyncpa [#allocation4], 1
    %s407 = scalar_lea.sflag [#allocation4], 1
    %408 = vsyncpa %s407, 1

</llo_original>
